<compile_context>
chip_gen: v6e
topology: v6e:2x2x1
jax: 0.10.0
libtpu: 0.0.40
codegen_flags: <defaults>
</compile_context>

<pallas_src>
import math

import jax
import jax.numpy as jnp
from jax.experimental import pallas as pl
from jax.experimental.pallas import tpu as pltpu

_TK_TARGET = 512  # K tile over the flattened input dimension


def _round_up(x, m):
    return (x + m - 1) // m * m


def _chip_budget():
    """Returns (vmem_capacity_bytes, is_small_mxu_chip) with safe fallbacks."""
    vmem_cap = None
    try:
        vmem_cap = int(pltpu.get_tpu_info().vmem_capacity_bytes)
    except Exception:
        vmem_cap = None
    kind = ""
    try:
        kind = jax.devices()[0].device_kind.lower()
    except Exception:
        pass
    is_v7 = "7" in kind
    is_small_mxu = any(t in kind for t in ("v2", "v3", "v4", "v5"))  # 128-wide MXU
    if vmem_cap is None:
        vmem_cap = (64 << 20) if is_v7 else (128 << 20)
    return vmem_cap, is_small_mxu


def _block_spec(shape, index_map, buffer_count=None):
    """BlockSpec with an optional explicit buffer count (graceful fallback)."""
    if buffer_count is not None:
        try:
            return pl.BlockSpec(shape, index_map,
                                pipeline_mode=pl.Buffered(buffer_count))
        except Exception:
            pass
    return pl.BlockSpec(shape, index_map)


def ann_fc_kernel(x_ref, w1_ref, w2_ref, y_ref, h_acc_ref):
    # x_ref    : (tm, tk)         batch tile of flattened activations, K-slice
    # w1_ref   : (n_pad, tk)      fc1 weight K-slice (torch layout, padded)
    # w2_ref   : (out_pad, n_pad) fc2 weight (torch layout, padded), VMEM-resident
    # y_ref    : (tm, out_pad)    lane-dense output tile
    # h_acc_ref: (tm, n_pad)      f32 hidden accumulator (scratch, persists over k)
    k = pl.program_id(1)

    @pl.when(k == 0)
    def _():
        h_acc_ref[...] = jnp.zeros_like(h_acc_ref)

    # Partial x @ w1.T : contract the last axis of both operands (no pre-transpose).
    h_acc_ref[...] += jax.lax.dot_general(
        x_ref[...], w1_ref[...], (((1,), (1,)), ((), ())),
        preferred_element_type=jnp.float32,
    )

    @pl.when(k == pl.num_programs(1) - 1)
    def _():
        # ReLU, cast back to the MXU operand dtype (no-op for f32), then h @ w2.T.
        h = jnp.maximum(h_acc_ref[...], 0.0).astype(w2_ref.dtype)
        y = jax.lax.dot_general(
            h, w2_ref[...], (((1,), (1,)), ((), ())),
            preferred_element_type=jnp.float32,
        )
        y_ref[...] = y.astype(y_ref.dtype)


def prepare_ann_fc_params(w1, w2, *, compute_dtype=jnp.bfloat16):
    """Pad + cast the (static) weights ONCE. Hoist this out of the per-call path."""
    N, in_sz = w1.shape
    out_sz, N2 = w2.shape
    assert N == N2, "fc1/fc2 hidden sizes disagree"

    in_pad = _round_up(in_sz, 128)
    tk = in_pad if in_pad <= _TK_TARGET else _TK_TARGET
    in_pad = _round_up(in_pad, tk)          # in_pad is an exact multiple of tk
    n_pad = _round_up(N, 128)
    out_pad = _round_up(out_sz, 128)

    w1_p = w1.astype(compute_dtype)
    if (n_pad, in_pad) != (N, in_sz):
        w1_p = jnp.zeros((n_pad, in_pad), compute_dtype).at[:N, :in_sz].set(w1_p)
    w2_p = w2.astype(compute_dtype)
    if (out_pad, n_pad) != (out_sz, N):
        w2_p = jnp.zeros((out_pad, n_pad), compute_dtype).at[:out_sz, :N].set(w2_p)

    return dict(
        w1_p=w1_p, w2_p=w2_p,
        in_sz=in_sz, N=N, out_sz=out_sz,
        in_pad=in_pad, n_pad=n_pad, out_pad=out_pad, tk=tk,
        compute_dtype=compute_dtype,
    )


def ann_fc_apply(params, x_nchw):
    """Forward pass with pre-padded weights (see prepare_ann_fc_params)."""
    B = x_nchw.shape[0]
    in_sz = params["in_sz"]
    assert math.prod(x_nchw.shape[1:]) == in_sz, "Flatten size != fc1 in_features"

    compute_dtype = params["compute_dtype"]
    in_pad, n_pad = params["in_pad"], params["n_pad"]
    out_pad, tk = params["out_pad"], params["tk"]
    w1_p, w2_p = params["w1_p"], params["w2_p"]
    out_sz = params["out_sz"]

    vmem_cap, is_small_mxu = _chip_budget()

    # Batch tile: 256 on 256-wide-MXU chips (v6e/v7x) when B is large, 128 on
    # older chips / mid B, padded-B when small. bf16 rounds to 16 sublanes.
    sub = 16 if compute_dtype == jnp.bfloat16 else 8
    if B >= 256 and not is_small_mxu:
        tm = 256
    elif B >= 128:
        tm = 128
    else:
        tm = _round_up(B, sub)
    b_pad = _round_up(B, tm)

    # Flatten (row-major, identical to nn.Flatten); skip the padding copy entirely
    # when already aligned (avoids an extra HBM round-trip of the activations).
    x_flat = x_nchw.reshape(B, in_sz).astype(compute_dtype)
    if b_pad == B and in_pad == in_sz:
        x_p = x_flat
    else:
        x_p = jnp.zeros((b_pad, in_pad), compute_dtype).at[:B, :in_sz].set(x_flat)

    n_bt = b_pad // tm
    n_k = in_pad // tk
    grid = (n_bt, n_k)

    itemsize = jnp.dtype(compute_dtype).itemsize
    w1_bufs = 1 if n_k == 1 else 2
    vmem_est = (
        2 * tm * tk * itemsize              # x tiles (double-buffered)
        + w1_bufs * n_pad * tk * itemsize   # w1 K-slices
        + 1 * out_pad * n_pad * itemsize    # w2 (single-buffered, resident)
        + 2 * tm * out_pad * 4              # y tiles (f32, double-buffered)
        + tm * n_pad * 4                    # hidden accumulator scratch
    )
    # Cap below physical VMEM with headroom for Mosaic scratch / DMA descriptors:
    # v7x (64 MiB) -> ~52 MiB; v5e/v6e (128 MiB) -> 100 MiB.
    vmem_cap_limit = min(max(vmem_cap - (12 << 20), 32 << 20), 100 << 20)
    vmem_limit = max(32 << 20, min(int(vmem_est * 5 // 4) + (2 << 20), vmem_cap_limit))

    cost = pl.CostEstimate(
        flops=2 * b_pad * (in_pad * n_pad + n_pad * out_pad),
        bytes_accessed=(
            x_p.size * itemsize
            + n_bt * w1_p.size * itemsize
            + w2_p.size * itemsize
            + b_pad * out_pad * 4
        ),
        transcendentals=0,
    )

    y_pad = pl.pallas_call(
        ann_fc_kernel,
        out_shape=jax.ShapeDtypeStruct((b_pad, out_pad), jnp.float32),
        grid=grid,
        in_specs=[
            _block_spec((tm, tk), lambda i, k: (i, k)),              # x: streams
            _block_spec((n_pad, tk), lambda i, k: (0, k),            # w1: K-sliced
                        buffer_count=1 if n_k == 1 else None),
            _block_spec((out_pad, n_pad), lambda i, k: (0, 0),       # w2: resident
                        buffer_count=1),
        ],
        out_specs=pl.BlockSpec((tm, out_pad), lambda i, k: (i, 0)),
        scratch_shapes=[pltpu.VMEM((tm, n_pad), jnp.float32)],
        compiler_params=pltpu.CompilerParams(
            dimension_semantics=("parallel", "arbitrary"),
            vmem_limit_bytes=vmem_limit,
        ),
        cost_estimate=cost,
    )(x_p, w1_p, w2_p)

    return y_pad[:B, :out_sz]


def ann_fc_forward(x_nchw, w1, w2, *, compute_dtype=jnp.bfloat16):
    """One-shot convenience wrapper. For repeated calls, hoist
    prepare_ann_fc_params() out of the hot path and call ann_fc_apply directly."""
    params = prepare_ann_fc_params(w1, w2, compute_dtype=compute_dtype)
    return ann_fc_apply(params, x_nchw)


def reference_forward(x_nchw, w1, w2):
    x_flat = x_nchw.reshape(x_nchw.shape[0], -1)
    h = jnp.maximum(x_flat @ w1.T, 0.0)
    return h @ w2.T


if __name__ == "__main__":
    # Small shapes consistent with the module:
    #   x: (batch=2, C=4, H=16, W=16) -> in_sz = 4*16*16 = 1024
    #   hidden N = 32, out_sz = 10  (both Linears bias-free, as in the module)
    B, C, H, W = 2, 4, 16, 16
    in_sz = C * H * W
    N = 32
    out_sz = 10

    key = jax.random.PRNGKey(0)
    kx, k1, k2 = jax.random.split(key, 3)

    x = jax.random.normal(kx, (B, C, H, W), dtype=jnp.float32)
    w1 = jax.random.uniform(
        k1, (N, in_sz), dtype=jnp.float32, minval=-1.0, maxval=1.0
    ) / jnp.sqrt(in_sz)
    w2 = jax.random.uniform(
        k2, (out_sz, N), dtype=jnp.float32, minval=-1.0, maxval=1.0
    ) / jnp.sqrt(N)

    y_ref = reference_forward(x, w1, w2)

    # Exact f32 path (weight prep hoisted out of the forward call).
    params_f32 = prepare_ann_fc_params(w1, w2, compute_dtype=jnp.float32)
    y_f32 = ann_fc_apply(params_f32, x)
    jax.block_until_ready(y_f32)
    assert y_f32.shape == (B, out_sz)
    assert jnp.allclose(y_f32, y_ref, atol=1e-3, rtol=1e-3)

    # bf16 production path: f32 accumulation inside each dot, but the hidden
    # activations are rounded to bf16 between the two matmuls -> looser tolerance.
    params_bf16 = prepare_ann_fc_params(w1, w2, compute_dtype=jnp.bfloat16)
    y_bf16 = ann_fc_apply(params_bf16, x)
    jax.block_until_ready(y_bf16)
    assert y_bf16.shape == (B, out_sz)
    assert jnp.allclose(y_bf16, y_ref, atol=5e-2, rtol=5e-2)

    print("KERNEL_OK")
</pallas_src>

<mosaic_0001>
module attributes {stable_mosaic.version = 11 : i64} {
  func.func @ann_fc_kernel(%arg0: i32, %arg1: i32, %arg2: memref<8x512xf32, #tpu.memory_space<vmem>>, %arg3: memref<128x512xf32, #tpu.memory_space<vmem>>, %arg4: memref<128x128xf32, #tpu.memory_space<vmem>>, %arg5: memref<8x128xf32, #tpu.memory_space<vmem>>, %arg6: memref<8x128xf32, #tpu.memory_space<vmem>>) attributes {dimension_semantics = [#tpu.dimension_semantics<parallel>, #tpu.dimension_semantics<arbitrary>], iteration_bounds = array<i64: 1, 2>, scalar_prefetch = 0 : i64, scratch_operands = 1 : i64, tpu.core_type = #tpu.core_type<tc>, window_params = [{transform_indices = @transform_0, window_bounds = array<i64: 8, 512>}, {transform_indices = @transform_1, window_bounds = array<i64: 128, 512>}, {pipeline_mode = #tpu.pipeline_mode<synchronous>, transform_indices = @transform_2, window_bounds = array<i64: 128, 128>}, {transform_indices = @transform_3, window_bounds = array<i64: 8, 128>}]} {
    %c0_i32 = arith.constant 0 : i32
    %0 = arith.cmpi eq, %arg1, %c0_i32 : i32
    %1 = arith.extui %0 : i1 to i32
    %c0_i32_0 = arith.constant 0 : i32
    %2 = arith.cmpi ne, %1, %c0_i32_0 : i32
    scf.if %2 {
      %cst_9 = arith.constant 0.000000e+00 : f32
      %12 = vector.broadcast %cst_9 : f32 to vector<8x128xf32>
      %c0_10 = arith.constant 0 : index
      %c0_11 = arith.constant 0 : index
      %13 = vector.load %arg6[%c0_10, %c0_11] : memref<8x128xf32, #tpu.memory_space<vmem>>, vector<8x128xf32>
      tpu.vector_store %arg6[%c0_10, %c0_11], %12 {strides = array<i32>} : memref<8x128xf32, #tpu.memory_space<vmem>>, vector<8x128xf32>,
    } else {
    }
    %c0 = arith.constant 0 : index
    %c0_1 = arith.constant 0 : index
    %3 = vector.load %arg6[%c0, %c0_1] : memref<8x128xf32, #tpu.memory_space<vmem>>, vector<8x128xf32>
    %c0_2 = arith.constant 0 : index
    %c0_3 = arith.constant 0 : index
    %4 = vector.load %arg2[%c0_2, %c0_3] : memref<8x512xf32, #tpu.memory_space<vmem>>, vector<8x512xf32>
    %c0_4 = arith.constant 0 : index
    %c0_5 = arith.constant 0 : index
    %5 = vector.load %arg3[%c0_4, %c0_5] : memref<128x512xf32, #tpu.memory_space<vmem>>, vector<128x512xf32>
    %cst = arith.constant dense<0.000000e+00> : vector<8x128xf32>
    %6 = tpu.matmul %4, %5, %cst {dimension_numbers = #tpu.dot_dimension_numbers<[1], [1], [0], [0], [0, 0, 1, 0], [], []>} : vector<8x512xf32>, vector<128x512xf32>, vector<8x128xf32> -> vector<8x128xf32>
    %7 = arith.addf %3, %6 : vector<8x128xf32>
    %c0_6 = arith.constant 0 : index
    %c0_7 = arith.constant 0 : index
    %8 = vector.load %arg6[%c0_6, %c0_7] : memref<8x128xf32, #tpu.memory_space<vmem>>, vector<8x128xf32>
    tpu.vector_store %arg6[%c0_6, %c0_7], %7 {strides = array<i32>} : memref<8x128xf32, #tpu.memory_space<vmem>>, vector<8x128xf32>,
    %c1_i32 = arith.constant 1 : i32
    %9 = arith.cmpi eq, %arg1, %c1_i32 : i32
    %10 = arith.extui %9 : i1 to i32
    %c0_i32_8 = arith.constant 0 : i32
    %11 = arith.cmpi ne, %10, %c0_i32_8 : i32
    scf.if %11 {
      %c0_9 = arith.constant 0 : index
      %c0_10 = arith.constant 0 : index
      %12 = vector.load %arg6[%c0_9, %c0_10] : memref<8x128xf32, #tpu.memory_space<vmem>>, vector<8x128xf32>
      %cst_11 = arith.constant 0.000000e+00 : f32
      %13 = vector.broadcast %cst_11 : f32 to vector<8x128xf32>
      %14 = arith.maximumf %12, %13 : vector<8x128xf32>
      %c0_12 = arith.constant 0 : index
      %c0_13 = arith.constant 0 : index
      %15 = vector.load %arg4[%c0_12, %c0_13] : memref<128x128xf32, #tpu.memory_space<vmem>>, vector<128x128xf32>
      %cst_14 = arith.constant dense<0.000000e+00> : vector<8x128xf32>
      %16 = tpu.matmul %14, %15, %cst_14 {dimension_numbers = #tpu.dot_dimension_numbers<[1], [1], [0], [0], [0, 0, 1, 0], [], []>} : vector<8x128xf32>, vector<128x128xf32>, vector<8x128xf32> -> vector<8x128xf32>
      %c0_15 = arith.constant 0 : index
      %c0_16 = arith.constant 0 : index
      %17 = vector.load %arg5[%c0_15, %c0_16] : memref<8x128xf32, #tpu.memory_space<vmem>>, vector<8x128xf32>
      tpu.vector_store %arg5[%c0_15, %c0_16], %16 {strides = array<i32>} : memref<8x128xf32, #tpu.memory_space<vmem>>, vector<8x128xf32>,
    } else {
    }
    return
  }
  func.func @transform_0(%arg0: i32, %arg1: i32) -> (i32, i32) {
    %c0_i32 = arith.constant 0 : i32
    return %arg0, %arg1 : i32, i32
  }
  func.func @transform_1(%arg0: i32, %arg1: i32) -> (i32, i32) {
    %c0_i32 = arith.constant 0 : i32
    %c0_i32_0 = arith.constant 0 : i32
    return %c0_i32, %arg1 : i32, i32
  }
  func.func @transform_2(%arg0: i32, %arg1: i32) -> (i32, i32) {
    %c0_i32 = arith.constant 0 : i32
    %c0_i32_0 = arith.constant 0 : i32
    %c0_i32_1 = arith.constant 0 : i32
    return %c0_i32, %c0_i32_0 : i32, i32
  }
  func.func @transform_3(%arg0: i32, %arg1: i32) -> (i32, i32) {
    %c0_i32 = arith.constant 0 : i32
    %c0_i32_0 = arith.constant 0 : i32
    return %arg0, %c0_i32 : i32, i32
  }
}

</mosaic_0001>

<llo_original>
// kernel: tpu_custom_call.1
$region0: #{tpu_custom_call.1}
  #allocation0 [shape = 'u32[]', space=smem, size = 0x4, offset = 0x4, fixed_abs, tag = 'smem constant byte address 0x4 - core index']
  #allocation1 [shape = 'u32[144,128]{1,0:T(1,128)}', space=vmem, size = 0x12000, scoped, tag = 'internal scratch']
  #allocation2 [shape = 'f32[8,128]{1,0:T(8,128)}', space=vmem, size = 0x1000, scoped, tag = 'scratch operand']
  %s0 = inlined_call_operand.hbm [shape: f32[8,1024], index: 0, kind: input, shape index: {}]
  %s1 = inlined_call_operand.hbm [shape: f32[128,1024], index: 1, kind: input, shape index: {}]
  %s2 = inlined_call_operand.hbm [shape: f32[128,128], index: 2, kind: input, shape index: {}]
  %s3 = inlined_call_operand.hbm [shape: f32[8,128], index: 3, kind: output, shape index: {}]
  %s4 = sld [smem:[#allocation0]]
  $region65: #{tpu_custom_call.1} parent=0
    _
  %s6 = ssub.s32 1, %s4
  %s7 = scalar_select 0, %s6, %s4
  $region1: #{tpu_custom_call.1} parent=0
    #allocation3 [shape = 'u8[32768]{0}', space=vmem, size = 0x8000, scoped, tag = 'input window, operand 0']
    #allocation4 [shape = 's32[2]{0}', space=sflag, size = 0x8, scoped, tag = 'scoped memory for tpu_custom_call.1']
    #allocation5 [shape = 's32[2]{0}', space=sflag, size = 0x8, scoped, tag = 'scoped memory for tpu_custom_call.1']
    #allocation6 [shape = 'u8[524288]{0}', space=vmem, size = 0x80000, scoped, tag = 'input window, operand 1']
    #allocation7 [shape = 's32[2]{0}', space=sflag, size = 0x8, scoped, tag = 'scoped memory for tpu_custom_call.1']
    #allocation8 [shape = 'u8[65536]{0}', space=vmem, size = 0x10000, scoped, tag = 'input window, operand 2, single buffered']
    #allocation9 [shape = 'u8[4096]{0}', space=vmem, size = 0x1000, scoped, tag = 'output window, operand 0, single buffered']
    %8 = vsyncpa [#allocation4], 0
    %s9 = scalar_lea.sflag [#allocation4], 1
    %10 = vsyncpa %s9, 0
    %11 = vsyncpa [#allocation7], 0
    %s12 = scalar_lea.sflag [#allocation7], 1
    %13 = vsyncpa %s12, 0
    %14 = vsyncpa [#allocation5], 0
    loop: start=0, step=1, limit=4
    $region2: #{tpu_custom_call.1} parent=1 // loop_pre_header
      _
    $region3: #{tpu_custom_call.1} parent=1 // loop_header
      %s16 = sphi 0, %s20
      %p17 = scmp.ge.s32.totalorder %s16, 4
      %s23 = sphi 0, %s35
      %s24 = sphi 0, %s31
      %s25 = sphi 0, %s23
      %s26 = sphi 0, %s24
      %s27 = sphi 0, %s25
      %s28 = sphi 0, %s26
      %s40 = sphi 0, %s42
      %s43 = sphi 0, %s40
      %s44 = sphi 0, %s43
      %s60 = sphi 0, %s44
      %s66 = sphi 0, %s68
      %s69 = sphi 0, %s66
      %s70 = sphi 0, %s69
      %s86 = sphi 0, %s70
      %s90 = sphi 0, %s90
      %s92 = sphi 0, %s90
      %s93 = sphi 0, %s92
      %s107 = sphi 0, %s93
      %s113 = sphi 0, %s115
      %s116 = sphi 0, %s113
      %s117 = sphi 0, %s116
      %s133 = sphi 0, %s117
    $region4: #{tpu_custom_call.1} parent=1 // loop_header_branch
      %19 = sbr.rel (%p17) target = $region8
    $region5: #{tpu_custom_call.1} parent=1 // loop_body
      %s21 = ssub.s32 %s16, 1
      %s22 = ssub.s32 %s16, 2
      %s29 = sadd.s32 1, %s24
      %p30 = scmp.ge.s32.totalorder %s29, 2
      %s31 = scalar_select %p30, 0, %s29
      %s32 = sadd.s32 1, %s23
      %s33 = scalar_select %p30, %s32, %s23
      %p34 = scmp.ge.s32.totalorder %s33, 1
      %s35 = scalar_select %p34, 0, %s33
      %s36 = ssub.s32 %s23, %s35
      %s37 = ssub.s32 %s24, %s31
      %s38 = sor.u32 %s36, %s37
      %p39 = scmp.eq.s32.totalorder %s38, 0
      %s41 = sadd.s32 %s40, 1
      %s42 = scalar_select %p39, %s40, %s41
      %p45 = pneg %p39
      %p46 = scmp.eq.s32.totalorder %s16, 1
      %p47 = por %p45, %p46
      %p48 = scmp.ne.s32.totalorder %s40, %s43
      %p49 = scmp.eq.s32.totalorder %s16, 0
      %p50 = por %p48, %p49
      %p51 = scmp.ne.s32.totalorder %s40, %s43
      %p52 = scmp.eq.s32.totalorder %s21, 1
      %p53 = por %p51, %p52
      %p54 = scmp.ne.s32.totalorder %s43, %s44
      %p55 = scmp.eq.s32.totalorder %s21, 0
      %p56 = por %p54, %p55
      %p57 = scmp.ne.s32.totalorder %s43, %s44
      %p58 = scmp.eq.s32.totalorder %s22, 1
      %p59 = por %p57, %p58
      %p61 = scmp.ne.s32.totalorder %s44, %s60
      %p62 = scmp.eq.s32.totalorder %s22, 0
      %p63 = por %p61, %p62
      %s64 = ssub.s32 %s24, %s31
      %p65 = scmp.eq.s32.totalorder %s64, 0
      %s67 = sadd.s32 %s66, 1
      %s68 = scalar_select %p65, %s66, %s67
      %p71 = pneg %p65
      %p72 = scmp.eq.s32.totalorder %s16, 1
      %p73 = por %p71, %p72
      %p74 = scmp.ne.s32.totalorder %s66, %s69
      %p75 = scmp.eq.s32.totalorder %s16, 0
      %p76 = por %p74, %p75
      %p77 = scmp.ne.s32.totalorder %s66, %s69
      %p78 = scmp.eq.s32.totalorder %s21, 1
      %p79 = por %p77, %p78
      %p80 = scmp.ne.s32.totalorder %s69, %s70
      %p81 = scmp.eq.s32.totalorder %s21, 0
      %p82 = por %p80, %p81
      %p83 = scmp.ne.s32.totalorder %s69, %s70
      %p84 = scmp.eq.s32.totalorder %s22, 1
      %p85 = por %p83, %p84
      %p87 = scmp.ne.s32.totalorder %s70, %s86
      %p88 = scmp.eq.s32.totalorder %s22, 0
      %p89 = por %p87, %p88
      %s91 = sadd.s32 %s90, 1
      %p94 = scmp.eq.s32.totalorder %s16, 1
      %p95 = scmp.ne.s32.totalorder %s90, %s92
      %p96 = scmp.eq.s32.totalorder %s16, 0
      %p97 = por %p95, %p96
      %p98 = scmp.ne.s32.totalorder %s90, %s92
      %p99 = scmp.eq.s32.totalorder %s21, 1
      %p100 = por %p98, %p99
      %p101 = scmp.ne.s32.totalorder %s92, %s93
      %p102 = scmp.eq.s32.totalorder %s21, 0
      %p103 = por %p101, %p102
      %p104 = scmp.ne.s32.totalorder %s92, %s93
      %p105 = scmp.eq.s32.totalorder %s22, 1
      %p106 = por %p104, %p105
      %p108 = scmp.ne.s32.totalorder %s93, %s107
      %p109 = scmp.eq.s32.totalorder %s22, 0
      %p110 = por %p108, %p109
      %s111 = ssub.s32 %s23, %s35
      %p112 = scmp.eq.s32.totalorder %s111, 0
      %s114 = sadd.s32 %s113, 1
      %s115 = scalar_select %p112, %s113, %s114
      %p118 = pneg %p112
      %p119 = scmp.eq.s32.totalorder %s16, 1
      %p120 = por %p118, %p119
      %p121 = scmp.ne.s32.totalorder %s113, %s116
      %p122 = scmp.eq.s32.totalorder %s16, 0
      %p123 = por %p121, %p122
      %p124 = scmp.ne.s32.totalorder %s113, %s116
      %p125 = scmp.eq.s32.totalorder %s21, 1
      %p126 = por %p124, %p125
      %p127 = scmp.ne.s32.totalorder %s116, %s117
      %p128 = scmp.eq.s32.totalorder %s21, 0
      %p129 = por %p127, %p128
      %p130 = scmp.ne.s32.totalorder %s116, %s117
      %p131 = scmp.eq.s32.totalorder %s22, 1
      %p132 = por %p130, %p131
      %p134 = scmp.ne.s32.totalorder %s117, %s133
      %p135 = scmp.eq.s32.totalorder %s22, 0
      %p136 = por %p134, %p135
      %p137 = scmp.le.s32.totalorder 1, %s16
      %p138 = scmp.lt.s32.totalorder %s16, 3
      %p139 = pnand %p137, %p138
      %p140 = pneg %p139
      // Predicated region
      $region9: #{tpu_custom_call.1} parent=5 // pred_check
        _
      $region10: #{tpu_custom_call.1} parent=5 // pred_check_branch
        %142 = sbr.rel (%p139) target = $region12
      $region11: #{tpu_custom_call.1} parent=5 // pred_region
        %s143 = ssub.s32 %s16, 1
        // Predicated region
        $region13: #{tpu_custom_call.1} parent=11 // pred_check
          %p144 = pneg %p103
        $region14: #{tpu_custom_call.1} parent=11 // pred_check_branch
          %146 = sbr.rel (%p144) target = $region16
        $region15: #{tpu_custom_call.1} parent=11 // pred_region
          %s148 = ssub.s32 2048, 2048
          %149 = vsyncadd [#allocation7], %s148
          %s150 = sshll.u32 [#allocation8], 4
          %s151 = int_to_ptr.vmem [resolvable:$true] %s150
          %156 = dma.hbm_to_vmem [thread:$0]  %s2, 2048, %s151, [#allocation7], 128, 128, 8
        $region16: #{tpu_custom_call.1} parent=11 // pred_fallthru
          _
      $region12: #{tpu_custom_call.1} parent=5 // pred_fallthru
        _
      %p157 = scmp.lt.s32.totalorder %s16, 2
      // Predicated region
      $region17: #{tpu_custom_call.1} parent=5 // pred_check
        %p158 = pneg %p157
      $region18: #{tpu_custom_call.1} parent=5 // pred_check_branch
        %160 = sbr.rel (%p158) target = $region20
      $region19: #{tpu_custom_call.1} parent=5 // pred_region
        // Predicated region
        $region21: #{tpu_custom_call.1} parent=19 // pred_check
          %p161 = pneg %p50
        $region22: #{tpu_custom_call.1} parent=19 // pred_check_branch
          %163 = sbr.rel (%p161) target = $region24
        $region23: #{tpu_custom_call.1} parent=19 // pred_region
          %s164 = sand.u32 %s40, 1
          %s165 = scalar_lea.sflag [#allocation4], %s164
          %s166 = sand.u32 %s40, 1
          %s167 = smul.addr %s166, 32
          %s168 = scalar_lea.vmem [#allocation3], %s167
          %s169 = smul.u32 4, %s24
          %s171 = ssub.s32 512, 512
          %172 = vsyncadd %s165, %s171
          %s173 = smul.addr %s23, 8
          %s174 = sadd.s32 %s169, %s173
          %s175 = smul.addr %s174, 128
          %s176 = scalar_lea.hbm %s0, %s175
          %s178 = sshll.u32 %s168, 4
          %s179 = int_to_ptr.vmem [resolvable:$true] %s178
          %181 = dma.hbm_to_vmem [thread:$0]  %s176, 512, %s179, %s165
        $region24: #{tpu_custom_call.1} parent=19 // pred_fallthru
          _
        // Predicated region
        $region25: #{tpu_custom_call.1} parent=19 // pred_check
          %p182 = pneg %p76
        $region26: #{tpu_custom_call.1} parent=19 // pred_check_branch
          %184 = sbr.rel (%p182) target = $region28
        $region27: #{tpu_custom_call.1} parent=19 // pred_region
          %s185 = sand.u32 %s16, 1
          %s186 = scalar_lea.sflag [#allocation7], %s185
          %s187 = sand.u32 %s66, 1
          %s188 = smul.addr %s187, 512
          %s189 = scalar_lea.vmem [#allocation6], %s188
          %s190 = smul.u32 4, %s24
          %s192 = ssub.s32 8192, 8192
          %193 = vsyncadd %s186, %s192
          %s194 = smul.addr %s190, 128
          %s195 = scalar_lea.hbm %s1, %s194
          %s196 = sshll.u32 %s189, 4
          %s197 = int_to_ptr.vmem [resolvable:$true] %s196
          %202 = dma.hbm_to_vmem [thread:$0]  %s195, 8192, %s197, %s186, 1024, 512, 32
        $region28: #{tpu_custom_call.1} parent=19 // pred_fallthru
          _
      $region20: #{tpu_custom_call.1} parent=5 // pred_fallthru
        _
      %p203 = scmp.le.s32.totalorder 1, %s16
      %p204 = scmp.lt.s32.totalorder %s16, 3
      %p205 = pnand %p203, %p204
      %p206 = pneg %p205
      // Predicated region
      $region29: #{tpu_custom_call.1} parent=5 // pred_check
        _
      $region30: #{tpu_custom_call.1} parent=5 // pred_check_branch
        %208 = sbr.rel (%p205) target = $region32
      $region31: #{tpu_custom_call.1} parent=5 // pred_region
        %s209 = ssub.s32 %s16, 1
        %s210 = sand.u32 %s43, 1
        %s211 = scalar_lea.sflag [#allocation4], %s210
        %s212 = sand.u32 %s43, 1
        %s213 = smul.addr %s212, 32
        %s214 = scalar_lea.vmem [#allocation3], %s213
        // Predicated region
        $region33: #{tpu_custom_call.1} parent=31 // pred_check
          %p215 = pneg %p56
        $region34: #{tpu_custom_call.1} parent=31 // pred_check_branch
          %217 = sbr.rel (%p215) target = $region36
        $region35: #{tpu_custom_call.1} parent=31 // pred_region
          %218 = dma.done %s211, 512
        $region36: #{tpu_custom_call.1} parent=31 // pred_fallthru
          _
        %s219 = sand.u32 %s21, 1
        %s220 = scalar_lea.sflag [#allocation7], %s219
        %s221 = sand.u32 %s69, 1
        %s222 = smul.addr %s221, 512
        %s223 = scalar_lea.vmem [#allocation6], %s222
        // Predicated region
        $region37: #{tpu_custom_call.1} parent=31 // pred_check
          %p224 = pneg %p82
        $region38: #{tpu_custom_call.1} parent=31 // pred_check_branch
          %226 = sbr.rel (%p224) target = $region40
        $region39: #{tpu_custom_call.1} parent=31 // pred_region
          %227 = dma.done %s220, 8192
        $region40: #{tpu_custom_call.1} parent=31 // pred_fallthru
          _
        // Predicated region
        $region41: #{tpu_custom_call.1} parent=31 // pred_check
          %p228 = pneg %p103
        $region42: #{tpu_custom_call.1} parent=31 // pred_check_branch
          %230 = sbr.rel (%p228) target = $region44
        $region43: #{tpu_custom_call.1} parent=31 // pred_region
          %231 = dma.done [#allocation7], 2048
        $region44: #{tpu_custom_call.1} parent=31 // pred_fallthru
          _
        %s232 = sand.u32 %s43, 1
        %s233 = scalar_lea.sflag [#allocation4], %s232
        %s234 = sand.u32 %s43, 1
        %s235 = smul.addr %s234, 32
        %s236 = scalar_lea.vmem [#allocation3], %s235
        %p237 = pneg %p56
        %p238 = pneg %p53
        %s239 = sand.u32 %s21, 1
        %s240 = scalar_lea.sflag [#allocation7], %s239
        %s241 = sand.u32 %s69, 1
        %s242 = smul.addr %s241, 512
        %s243 = scalar_lea.vmem [#allocation6], %s242
        %p244 = pneg %p82
        %p245 = pneg %p79
        %p246 = pneg %p103
        %p247 = pneg %p100
        %p248 = pneg %p129
        %p249 = pneg %p126
        %s250 = smul.u32 4, %s26
        %s251 = smul.u32 4, %s26
        %p252 = scmp.eq.s32.totalorder %s26, 0
        // Predicated region
        $region45: #{tpu_custom_call.1} parent=31 // pred_check
          %p253 = pneg %p252
        $region46: #{tpu_custom_call.1} parent=31 // pred_check_branch
          %255 = sbr.rel (%p253) target = $region48
        $region47: #{tpu_custom_call.1} parent=31 // pred_region
          %256 = vst [vmem:[#allocation2] sm:$0xff] 0.0
        $region48: #{tpu_custom_call.1} parent=31 // pred_fallthru
          _
        %v257 = vld [vmem:[#allocation2] sm:$0xff]
        %v258 = vld [vmem:[%s214] sm:$0xff]
        %v259 = vld [vmem:[%s214 + $0x8] sm:$0xff]
        %v260 = vld [vmem:[%s214 + $0x10] sm:$0xff]
        %v261 = vld [vmem:[%s214 + $0x18] sm:$0xff]
        %v262 = vld [vmem:[%s223] sm:$0xff]
        %v263 = vld [vmem:[%s223 + $0x8] sm:$0xff]
        %v264 = vld [vmem:[%s223 + $0x10] sm:$0xff]
        %v265 = vld [vmem:[%s223 + $0x18] sm:$0xff]
        %v266 = vld [vmem:[%s223 + $0x20] sm:$0xff]
        %v267 = vld [vmem:[%s223 + $0x28] sm:$0xff]
        %v268 = vld [vmem:[%s223 + $0x30] sm:$0xff]
        %v269 = vld [vmem:[%s223 + $0x38] sm:$0xff]
        %v270 = vld [vmem:[%s223 + $0x40] sm:$0xff]
        %v271 = vld [vmem:[%s223 + $0x48] sm:$0xff]
        %v272 = vld [vmem:[%s223 + $0x50] sm:$0xff]
        %v273 = vld [vmem:[%s223 + $0x58] sm:$0xff]
        %v274 = vld [vmem:[%s223 + $0x60] sm:$0xff]
        %v275 = vld [vmem:[%s223 + $0x68] sm:$0xff]
        %v276 = vld [vmem:[%s223 + $0x70] sm:$0xff]
        %v277 = vld [vmem:[%s223 + $0x78] sm:$0xff]
        %v278 = vld [vmem:[%s223 + $0x80] sm:$0xff]
        %v279 = vld [vmem:[%s223 + $0x88] sm:$0xff]
        %v280 = vld [vmem:[%s223 + $0x90] sm:$0xff]
        %v281 = vld [vmem:[%s223 + $0x98] sm:$0xff]
        %v282 = vld [vmem:[%s223 + $0xa0] sm:$0xff]
        %v283 = vld [vmem:[%s223 + $0xa8] sm:$0xff]
        %v284 = vld [vmem:[%s223 + $0xb0] sm:$0xff]
        %v285 = vld [vmem:[%s223 + $0xb8] sm:$0xff]
        %v286 = vld [vmem:[%s223 + $0xc0] sm:$0xff]
        %v287 = vld [vmem:[%s223 + $0xc8] sm:$0xff]
        %v288 = vld [vmem:[%s223 + $0xd0] sm:$0xff]
        %v289 = vld [vmem:[%s223 + $0xd8] sm:$0xff]
        %v290 = vld [vmem:[%s223 + $0xe0] sm:$0xff]
        %v291 = vld [vmem:[%s223 + $0xe8] sm:$0xff]
        %v292 = vld [vmem:[%s223 + $0xf0] sm:$0xff]
        %v293 = vld [vmem:[%s223 + $0xf8] sm:$0xff]
        %v294 = vld [vmem:[%s223 + $0x100] sm:$0xff]
        %v295 = vld [vmem:[%s223 + $0x108] sm:$0xff]
        %v296 = vld [vmem:[%s223 + $0x110] sm:$0xff]
        %v297 = vld [vmem:[%s223 + $0x118] sm:$0xff]
        %v298 = vld [vmem:[%s223 + $0x120] sm:$0xff]
        %v299 = vld [vmem:[%s223 + $0x128] sm:$0xff]
        %v300 = vld [vmem:[%s223 + $0x130] sm:$0xff]
        %v301 = vld [vmem:[%s223 + $0x138] sm:$0xff]
        %v302 = vld [vmem:[%s223 + $0x140] sm:$0xff]
        %v303 = vld [vmem:[%s223 + $0x148] sm:$0xff]
        %v304 = vld [vmem:[%s223 + $0x150] sm:$0xff]
        %v305 = vld [vmem:[%s223 + $0x158] sm:$0xff]
        %v306 = vld [vmem:[%s223 + $0x160] sm:$0xff]
        %v307 = vld [vmem:[%s223 + $0x168] sm:$0xff]
        %v308 = vld [vmem:[%s223 + $0x170] sm:$0xff]
        %v309 = vld [vmem:[%s223 + $0x178] sm:$0xff]
        %v310 = vld [vmem:[%s223 + $0x180] sm:$0xff]
        %v311 = vld [vmem:[%s223 + $0x188] sm:$0xff]
        %v312 = vld [vmem:[%s223 + $0x190] sm:$0xff]
        %v313 = vld [vmem:[%s223 + $0x198] sm:$0xff]
        %v314 = vld [vmem:[%s223 + $0x1a0] sm:$0xff]
        %v315 = vld [vmem:[%s223 + $0x1a8] sm:$0xff]
        %v316 = vld [vmem:[%s223 + $0x1b0] sm:$0xff]
        %v317 = vld [vmem:[%s223 + $0x1b8] sm:$0xff]
        %v318 = vld [vmem:[%s223 + $0x1c0] sm:$0xff]
        %v319 = vld [vmem:[%s223 + $0x1c8] sm:$0xff]
        %v320 = vld [vmem:[%s223 + $0x1d0] sm:$0xff]
        %v321 = vld [vmem:[%s223 + $0x1d8] sm:$0xff]
        %v322 = vld [vmem:[%s223 + $0x1e0] sm:$0xff]
        %v323 = vld [vmem:[%s223 + $0x1e8] sm:$0xff]
        %v324 = vld [vmem:[%s223 + $0x1f0] sm:$0xff]
        %v325 = vld [vmem:[%s223 + $0x1f8] sm:$0xff]
        %326 = vmatprep.subr.mxu0 %v323
        %327 = vmatpush1.xpose.msra.mxu0 %v322
        %328 = vmatprep.subr.mxu0 %v319
        %329 = vmatpush1.xpose.msra.mxu0 %v318
        %330 = vmatprep.subr.mxu0 %v315
        %331 = vmatpush1.xpose.msra.mxu0 %v314
        %332 = vmatprep.subr.mxu0 %v311
        %333 = vmatpush1.xpose.msra.mxu0 %v310
        %334 = vmatprep.subr.mxu0 %v307
        %335 = vmatpush1.xpose.msra.mxu0 %v306
        %336 = vmatprep.subr.mxu0 %v303
        %337 = vmatpush1.xpose.msra.mxu0 %v302
        %338 = vmatprep.subr.mxu0 %v299
        %339 = vmatpush1.xpose.msra.mxu0 %v298
        %340 = vmatprep.subr.mxu0 %v295
        %341 = vmatpush1.xpose.msra.mxu0 %v294
        %342 = vmatprep.subr.mxu0 %v291
        %343 = vmatpush1.xpose.msra.mxu0 %v290
        %344 = vmatprep.subr.mxu0 %v287
        %345 = vmatpush1.xpose.msra.mxu0 %v286
        %346 = vmatprep.subr.mxu0 %v283
        %347 = vmatpush1.xpose.msra.mxu0 %v282
        %348 = vmatprep.subr.mxu0 %v279
        %349 = vmatpush1.xpose.msra.mxu0 %v278
        %350 = vmatprep.subr.mxu0 %v275
        %351 = vmatpush1.xpose.msra.mxu0 %v274
        %352 = vmatprep.subr.mxu0 %v271
        %353 = vmatpush1.xpose.msra.mxu0 %v270
        %354 = vmatprep.subr.mxu0 %v267
        %355 = vmatpush1.xpose.msra.mxu0 %v266
        %356 = vmatprep.subr.mxu0 %v263
        %357 = vmatpush1.xpose.msra.mxu0 %v262
        %358 = vmatprep.subr.mxu0 0.0
        %359 = vmatpush2.xpose.msra.mxu0 0.0
        %360 = vmatprep.subr.mxu0 0.0
        %361 = vmatpush2.xpose.msra.mxu0 0.0
        %362 = vmatprep.subr.mxu0 0.0
        %363 = vmatpush2.xpose.msra.mxu0 0.0
        %364 = vmatprep.subr.mxu0 0.0
        %365 = vmatpush2.xpose.msra.mxu0 0.0
        %366 = vmatprep.subr.mxu0 0.0
        %367 = vmatpush2.xpose.msra.mxu0 0.0
        %368 = vmatprep.subr.mxu0 0.0
        %369 = vmatpush2.xpose.msra.mxu0 0.0
        %370 = vmatprep.subr.mxu0 0.0
        %371 = vmatpush2.xpose.msra.mxu0 0.0
        %372 = vmatprep.subr.mxu0 0.0
        %373 = vmatpush2.xpose.msra.mxu0 0.0
        %374 = vmatprep.subr.mxu0 0.0
        %375 = vmatpush2.xpose.msra.mxu0 0.0
        %376 = vmatprep.subr.mxu0 0.0
        %377 = vmatpush2.xpose.msra.mxu0 0.0
        %378 = vmatprep.subr.mxu0 0.0
        %379 = vmatpush2.xpose.msra.mxu0 0.0
        %380 = vmatprep.subr.mxu0 0.0
        %381 = vmatpush2.xpose.msra.mxu0 0.0
        %382 = vmatprep.subr.mxu0 0.0
        %383 = vmatpush2.xpose.msra.mxu0 0.0
        %384 = vmatprep.subr.mxu0 0.0
        %385 = vmatpush2.xpose.msra.mxu0 0.0
        %386 = vmatprep.subr.mxu0 0.0
        %387 = vmatpush2.xpose.msra.mxu0 0.0
        %388 = vmatprep.subr.mxu0 0.0
        %389 = vmatpush2.xpose.msra.mxu0 0.0
        %390 = vmatprep.mubr.f32.mxu0 %v259
        %391 = vmatmul.mubr.f32.gmra.mxu0 %v258
        %v392 = vpop.f32.mrf.mxu0
        %v393 = vadd.f32 0.0, %v392
        %v394 = vpop.f32.mrf.mxu0
        %395 = vdwg.mxu0
        %396 = vmatprep.subr.mxu0 %v325
        %397 = vmatpush1.xpose.msra.mxu0 %v324
        %398 = vmatprep.subr.mxu0 %v321
        %399 = vmatpush1.xpose.msra.mxu0 %v320
        %400 = vmatprep.subr.mxu0 %v317
        %401 = vmatpush1.xpose.msra.mxu0 %v316
        %402 = vmatprep.subr.mxu0 %v313
        %403 = vmatpush1.xpose.msra.mxu0 %v312
        %404 = vmatprep.subr.mxu0 %v309
        %405 = vmatpush1.xpose.msra.mxu0 %v308
        %406 = vmatprep.subr.mxu0 %v305
        %407 = vmatpush1.xpose.msra.mxu0 %v304
        %408 = vmatprep.subr.mxu0 %v301
        %409 = vmatpush1.xpose.msra.mxu0 %v300
        %410 = vmatprep.subr.mxu0 %v297
        %411 = vmatpush1.xpose.msra.mxu0 %v296
        %412 = vmatprep.subr.mxu0 %v293
        %413 = vmatpush1.xpose.msra.mxu0 %v292
        %414 = vmatprep.subr.mxu0 %v289
        %415 = vmatpush1.xpose.msra.mxu0 %v288
        %416 = vmatprep.subr.mxu0 %v285
        %417 = vmatpush1.xpose.msra.mxu0 %v284
        %418 = vmatprep.subr.mxu0 %v281
        %419 = vmatpush1.xpose.msra.mxu0 %v280
        %420 = vmatprep.subr.mxu0 %v277
        %421 = vmatpush1.xpose.msra.mxu0 %v276
        %422 = vmatprep.subr.mxu0 %v273
        %423 = vmatpush1.xpose.msra.mxu0 %v272
        %424 = vmatprep.subr.mxu0 %v269
        %425 = vmatpush1.xpose.msra.mxu0 %v268
        %426 = vmatprep.subr.mxu0 %v265
        %427 = vmatpush1.xpose.msra.mxu0 %v264
        %428 = vmatprep.subr.mxu0 0.0
        %429 = vmatpush2.xpose.msra.mxu0 0.0
        %430 = vmatprep.subr.mxu0 0.0
        %431 = vmatpush2.xpose.msra.mxu0 0.0
        %432 = vmatprep.subr.mxu0 0.0
        %433 = vmatpush2.xpose.msra.mxu0 0.0
        %434 = vmatprep.subr.mxu0 0.0
        %435 = vmatpush2.xpose.msra.mxu0 0.0
        %436 = vmatprep.subr.mxu0 0.0
        %437 = vmatpush2.xpose.msra.mxu0 0.0
        %438 = vmatprep.subr.mxu0 0.0
        %439 = vmatpush2.xpose.msra.mxu0 0.0
        %440 = vmatprep.subr.mxu0 0.0
        %441 = vmatpush2.xpose.msra.mxu0 0.0
        %442 = vmatprep.subr.mxu0 0.0
        %443 = vmatpush2.xpose.msra.mxu0 0.0
        %444 = vmatprep.subr.mxu0 0.0
        %445 = vmatpush2.xpose.msra.mxu0 0.0
        %446 = vmatprep.subr.mxu0 0.0
        %447 = vmatpush2.xpose.msra.mxu0 0.0
        %448 = vmatprep.subr.mxu0 0.0
        %449 = vmatpush2.xpose.msra.mxu0 0.0
        %450 = vmatprep.subr.mxu0 0.0
        %451 = vmatpush2.xpose.msra.mxu0 0.0
        %452 = vmatprep.subr.mxu0 0.0
        %453 = vmatpush2.xpose.msra.mxu0 0.0
        %454 = vmatprep.subr.mxu0 0.0
        %455 = vmatpush2.xpose.msra.mxu0 0.0
        %456 = vmatprep.subr.mxu0 0.0
        %457 = vmatpush2.xpose.msra.mxu0 0.0
        %458 = vmatprep.subr.mxu0 0.0
        %459 = vmatpush2.xpose.msra.mxu0 0.0
        %460 = vmatprep.mubr.f32.mxu0 %v261
        %461 = vmatmul.mubr.f32.gmra.mxu0 %v260
        %v462 = vpop.f32.mrf.mxu0
        %v463 = vadd.f32 %v393, %v462
        %v464 = vpop.f32.mrf.mxu0
        %465 = vdwg.mxu0
        %v466 = vadd.f32 %v257, %v463
        %467 = vst [vmem:[#allocation2] sm:$0xff] %v466
        %p468 = scmp.eq.s32.totalorder %s26, 1
        // Predicated region
        $region49: #{tpu_custom_call.1} parent=31 // pred_check
          %p469 = pneg %p468
        $region50: #{tpu_custom_call.1} parent=31 // pred_check_branch
          %471 = sbr.rel (%p469) target = $region52
        $region51: #{tpu_custom_call.1} parent=31 // pred_region
          %v472 = vld [vmem:[#allocation2] sm:$0xff]
          %v473 = vmax.f32 %v472, 0.0
          %v474 = vld [vmem:[#allocation8] sm:$0xff]
          %v475 = vld [vmem:[#allocation8 + $0x8] sm:$0xff]
          %v476 = vld [vmem:[#allocation8 + $0x10] sm:$0xff]
          %v477 = vld [vmem:[#allocation8 + $0x18] sm:$0xff]
          %v478 = vld [vmem:[#allocation8 + $0x20] sm:$0xff]
          %v479 = vld [vmem:[#allocation8 + $0x28] sm:$0xff]
          %v480 = vld [vmem:[#allocation8 + $0x30] sm:$0xff]
          %v481 = vld [vmem:[#allocation8 + $0x38] sm:$0xff]
          %v482 = vld [vmem:[#allocation8 + $0x40] sm:$0xff]
          %v483 = vld [vmem:[#allocation8 + $0x48] sm:$0xff]
          %v484 = vld [vmem:[#allocation8 + $0x50] sm:$0xff]
          %v485 = vld [vmem:[#allocation8 + $0x58] sm:$0xff]
          %v486 = vld [vmem:[#allocation8 + $0x60] sm:$0xff]
          %v487 = vld [vmem:[#allocation8 + $0x68] sm:$0xff]
          %v488 = vld [vmem:[#allocation8 + $0x70] sm:$0xff]
          %v489 = vld [vmem:[#allocation8 + $0x78] sm:$0xff]
          %490 = vmatprep.subr.mxu0 0.0
          %491 = vmatpush1.xpose.msra.mxu0 %v489
          %492 = vmatprep.subr.mxu0 0.0
          %493 = vmatpush1.xpose.msra.mxu0 %v488
          %494 = vmatprep.subr.mxu0 0.0
          %495 = vmatpush1.xpose.msra.mxu0 %v487
          %496 = vmatprep.subr.mxu0 0.0
          %497 = vmatpush1.xpose.msra.mxu0 %v486
          %498 = vmatprep.subr.mxu0 0.0
          %499 = vmatpush1.xpose.msra.mxu0 %v485
          %500 = vmatprep.subr.mxu0 0.0
          %501 = vmatpush1.xpose.msra.mxu0 %v484
          %502 = vmatprep.subr.mxu0 0.0
          %503 = vmatpush1.xpose.msra.mxu0 %v483
          %504 = vmatprep.subr.mxu0 0.0
          %505 = vmatpush1.xpose.msra.mxu0 %v482
          %506 = vmatprep.subr.mxu0 0.0
          %507 = vmatpush1.xpose.msra.mxu0 %v481
          %508 = vmatprep.subr.mxu0 0.0
          %509 = vmatpush1.xpose.msra.mxu0 %v480
          %510 = vmatprep.subr.mxu0 0.0
          %511 = vmatpush1.xpose.msra.mxu0 %v479
          %512 = vmatprep.subr.mxu0 0.0
          %513 = vmatpush1.xpose.msra.mxu0 %v478
          %514 = vmatprep.subr.mxu0 0.0
          %515 = vmatpush1.xpose.msra.mxu0 %v477
          %516 = vmatprep.subr.mxu0 0.0
          %517 = vmatpush1.xpose.msra.mxu0 %v476
          %518 = vmatprep.subr.mxu0 0.0
          %519 = vmatpush1.xpose.msra.mxu0 %v475
          %520 = vmatprep.subr.mxu0 0.0
          %521 = vmatpush1.xpose.msra.mxu0 %v474
          %522 = vmatprep.subr.mxu0 0.0
          %523 = vmatpush2.xpose.msra.mxu0 0.0
          %524 = vmatprep.subr.mxu0 0.0
          %525 = vmatpush2.xpose.msra.mxu0 0.0
          %526 = vmatprep.subr.mxu0 0.0
          %527 = vmatpush2.xpose.msra.mxu0 0.0
          %528 = vmatprep.subr.mxu0 0.0
          %529 = vmatpush2.xpose.msra.mxu0 0.0
          %530 = vmatprep.subr.mxu0 0.0
          %531 = vmatpush2.xpose.msra.mxu0 0.0
          %532 = vmatprep.subr.mxu0 0.0
          %533 = vmatpush2.xpose.msra.mxu0 0.0
          %534 = vmatprep.subr.mxu0 0.0
          %535 = vmatpush2.xpose.msra.mxu0 0.0
          %536 = vmatprep.subr.mxu0 0.0
          %537 = vmatpush2.xpose.msra.mxu0 0.0
          %538 = vmatprep.subr.mxu0 0.0
          %539 = vmatpush2.xpose.msra.mxu0 0.0
          %540 = vmatprep.subr.mxu0 0.0
          %541 = vmatpush2.xpose.msra.mxu0 0.0
          %542 = vmatprep.subr.mxu0 0.0
          %543 = vmatpush2.xpose.msra.mxu0 0.0
          %544 = vmatprep.subr.mxu0 0.0
          %545 = vmatpush2.xpose.msra.mxu0 0.0
          %546 = vmatprep.subr.mxu0 0.0
          %547 = vmatpush2.xpose.msra.mxu0 0.0
          %548 = vmatprep.subr.mxu0 0.0
          %549 = vmatpush2.xpose.msra.mxu0 0.0
          %550 = vmatprep.subr.mxu0 0.0
          %551 = vmatpush2.xpose.msra.mxu0 0.0
          %552 = vmatprep.subr.mxu0 0.0
          %553 = vmatpush2.xpose.msra.mxu0 0.0
          %554 = vmatprep.mubr.f32.mxu0 0.0
          %555 = vmatmul.mubr.f32.gmra.mxu0 %v473
          %v556 = vpop.f32.mrf.mxu0
          %v557 = vadd.f32 0.0, %v556
          %v558 = vpop.f32.mrf.mxu0
          %559 = vdwg.mxu0
          %560 = vst [vmem:[#allocation9] sm:$0xff] %v557
        $region52: #{tpu_custom_call.1} parent=31 // pred_fallthru
          _
        // Predicated region
        $region53: #{tpu_custom_call.1} parent=31 // pred_check
          %p561 = pneg %p126
        $region54: #{tpu_custom_call.1} parent=31 // pred_check_branch
          %563 = sbr.rel (%p561) target = $region56
        $region55: #{tpu_custom_call.1} parent=31 // pred_region
          %s565 = ssub.s32 128, 128
          %566 = vsyncadd [#allocation5], %s565
          %s567 = smul.addr %s25, 128
          %s568 = scalar_lea.hbm %s3, %s567
          %s570 = sshll.u32 [#allocation9], 4
          %s571 = int_to_ptr.vmem [resolvable:$true] %s570
          %573 = dma.vmem_to_hbm [thread:$0]  %s571, 128, %s568, [#allocation5]
        $region56: #{tpu_custom_call.1} parent=31 // pred_fallthru
          _
        // Predicated region
        $region57: #{tpu_custom_call.1} parent=31 // pred_check
          %p574 = pneg %p126
        $region58: #{tpu_custom_call.1} parent=31 // pred_check_branch
          %576 = sbr.rel (%p574) target = $region60
        $region59: #{tpu_custom_call.1} parent=31 // pred_region
          %577 = dma.done [#allocation5], 128
        $region60: #{tpu_custom_call.1} parent=31 // pred_fallthru
          _
      $region32: #{tpu_custom_call.1} parent=5 // pred_fallthru
        _
      %p578 = scmp.le.s32.totalorder 2, %s16
      // Predicated region
      $region61: #{tpu_custom_call.1} parent=5 // pred_check
        %p579 = pneg %p578
      $region62: #{tpu_custom_call.1} parent=5 // pred_check_branch
        %581 = sbr.rel (%p579) target = $region64
      $region63: #{tpu_custom_call.1} parent=5 // pred_region
        %s582 = ssub.s32 %s16, 2
      $region64: #{tpu_custom_call.1} parent=5 // pred_fallthru
        _
    $region6: #{tpu_custom_call.1} parent=1 // loop_footer
      %s20 = sadd.s32 1, %s16
    $region7: #{tpu_custom_call.1} parent=1 // loop_footer_branch
      %15 = sbr.rel target = $region3
    $region8: #{tpu_custom_call.1} parent=1 // loop_exit
      _
    %583 = vsyncpa [#allocation4], 1
    %s584 = scalar_lea.sflag [#allocation4], 1
    %585 = vsyncpa %s584, 1
    %586 = vsyncpa [#allocation7], 1
    %s587 = scalar_lea.sflag [#allocation7], 1
    %588 = vsyncpa %s587, 1
    %589 = vsyncpa [#allocation5], 1
    %s590 = scalar_lea.sflag [#allocation5], 1
    %591 = vsyncpa %s590, 1

</llo_original>
